<compile_context>
chip_gen: v7x
topology: tpu7x:2x2x1
jax: 0.10.0
libtpu: 0.0.40
codegen_flags: <defaults>
</compile_context>

<pallas_src>
import math

import jax
import jax.numpy as jnp
from jax.experimental import pallas as pl
from jax.experimental.pallas import tpu as pltpu


def _round_up(x, m):
    return (x + m - 1) // m * m


def _clip_loss_kernel(img_ref, txt_ref, wimg_ref, wtxt_ref, lbl_ref, scale_ref,
                      partial_ref):
    """One image-batch tile: encoders -> normalize -> logits -> CE partial sum."""
    scale = scale_ref[0]                                           # SMEM scalar

    # ---- encoders (bf16 operands, f32 MXU accumulation) ----
    img_emb = jnp.dot(img_ref[...], wimg_ref[...],
                      preferred_element_type=jnp.float32)          # [tb, E] f32
    txt_emb = jnp.dot(txt_ref[...], wtxt_ref[...],
                      preferred_element_type=jnp.float32)          # [B,  E] f32

    # ---- L2-normalize embeddings (CLIP), f32 ----
    # logit_scale is fused into the image-row normalizer ([tb,1] column), so the
    # [tb, B] logits block never needs a separate scaling pass.
    img_emb = img_emb * (scale * jax.lax.rsqrt(
        jnp.sum(img_emb * img_emb, axis=-1, keepdims=True) + 1e-12))
    txt_emb = txt_emb * jax.lax.rsqrt(
        jnp.sum(txt_emb * txt_emb, axis=-1, keepdims=True) + 1e-12)

    # ---- logits_per_image tile = (scale*img_emb) @ txt_emb.T (bf16 MXU) ----
    # TODO(synk): at large B keep txt_emb in an [E, B] transposed scratch (written
    # once) so Mosaic does not re-transpose the RHS per batch tile.
    logits = jax.lax.dot_general(
        img_emb.astype(jnp.bfloat16), txt_emb.astype(jnp.bfloat16),
        (((1,), (1,)), ((), ())),
        preferred_element_type=jnp.float32)                        # [tb, B] f32

    # ---- CrossEntropyLoss partial sum (mean finished in the wrapper) ----
    # TODO(synk): at B in the tens of thousands this should become an online
    # (flash-style) log-sum-exp over text tiles instead of a full [tb, B] block.
    lbl = lbl_ref[...]                                             # [tb, 1] i32
    m = jnp.max(logits, axis=-1, keepdims=True)                    # [tb, 1]
    lse = m + jnp.log(jnp.sum(jnp.exp(logits - m), axis=-1, keepdims=True))
    col = jax.lax.broadcasted_iota(jnp.int32, logits.shape, 1)     # [tb, B]
    tgt = jnp.sum(jnp.where(col == lbl, logits, 0.0),
                  axis=-1, keepdims=True)                          # [tb, 1]
    valid = (lbl >= 0).astype(jnp.float32)                         # pad rows -> 0
    psum = jnp.sum((lse - tgt) * valid)                            # scalar

    # lane-dense writeback of the per-tile partial sum (unmasked vector store)
    partial_ref[...] = jnp.full(partial_ref.shape, psum, dtype=partial_ref.dtype)


def clip_loss(image_nchw, text_feat, w_img, w_txt, labels, logit_scale,
              resize_hw=(16, 16), batch_tile=128):
    """Pallas CLIPLoss forward.  Returns a scalar float32 loss."""
    B, C = image_nchw.shape[0], image_nchw.shape[1]

    # preprocess: transforms.Resize([224, 224]) stand-in at toy resolution.
    # TODO(synk): the real module resizes to 224x224 (flat_dim ~150K); that
    # size additionally requires gridding the encoder contraction (K) axis.
    resized = jax.image.resize(
        image_nchw.astype(jnp.float32),
        (B, C, resize_hw[0], resize_hw[1]), method="bilinear")
    img_flat = resized.reshape(B, -1)                              # [B, C*H*W]
    d_img = img_flat.shape[1]
    t_dim = text_feat.shape[1]
    embed = w_img.shape[1]

    # Batch tiling: image rows are gridded; text + weights stay VMEM-resident.
    tb = min(batch_tile, _round_up(B, 8))
    b_pad = _round_up(B, tb)
    nt = b_pad // tb

    if b_pad == B:
        img_bf16 = img_flat.astype(jnp.bfloat16)
        lbl_pad = labels.astype(jnp.int32).reshape(B, 1)
    else:
        img_bf16 = jnp.zeros((b_pad, d_img), jnp.bfloat16).at[:B].set(
            img_flat.astype(jnp.bfloat16))
        lbl_pad = jnp.full((b_pad, 1), -1, jnp.int32).at[:B, 0].set(
            labels.astype(jnp.int32))
    scale_arr = jnp.asarray([logit_scale], dtype=jnp.float32)

    # TODO(synk): for real CLIP sizes (flat_dim ~150K, EMBED 512+) the encoder
    # contraction (K) must also be gridded ("arbitrary" axis + f32 accumulator)
    # so w_img tiles fit v7x's 64 MiB VMEM; not needed at these toy shapes.
    partials = pl.pallas_call(
        _clip_loss_kernel,
        grid=(nt,),
        in_specs=[
            pl.BlockSpec((tb, d_img), lambda i: (i, 0)),           # image rows
            pl.BlockSpec((B, t_dim), lambda i: (0, 0)),            # text (resident)
            pl.BlockSpec((d_img, embed), lambda i: (0, 0)),        # W_img (resident)
            pl.BlockSpec((t_dim, embed), lambda i: (0, 0)),        # W_txt (resident)
            pl.BlockSpec((tb, 1), lambda i: (i, 0)),               # labels
            pl.BlockSpec(memory_space=pltpu.MemorySpace.SMEM),     # logit_scale
        ],
        out_specs=pl.BlockSpec((1, 8, 128), lambda i: (i, 0, 0)),
        out_shape=jax.ShapeDtypeStruct((nt, 8, 128), jnp.float32),
        compiler_params=pltpu.CompilerParams(
            dimension_semantics=("parallel",)),
    )(img_bf16, text_feat.astype(jnp.bfloat16),
      w_img.astype(jnp.bfloat16), w_txt.astype(jnp.bfloat16),
      lbl_pad, scale_arr)

    # mean reduction over the true batch (nn.CrossEntropyLoss default)
    return jnp.sum(partials[:, 0, 0]) / B


def _reference_loss(image_nchw, text_feat, w_img, w_txt, labels, logit_scale,
                    resize_hw=(16, 16)):
    """Pure-JAX reference with the same bf16-operand / f32-accumulate math."""
    B, C = image_nchw.shape[0], image_nchw.shape[1]
    resized = jax.image.resize(
        image_nchw.astype(jnp.float32),
        (B, C, resize_hw[0], resize_hw[1]), method="bilinear")
    img_flat = resized.reshape(B, -1)
    img = jnp.dot(img_flat.astype(jnp.bfloat16), w_img.astype(jnp.bfloat16),
                  preferred_element_type=jnp.float32)
    txt = jnp.dot(text_feat.astype(jnp.bfloat16), w_txt.astype(jnp.bfloat16),
                  preferred_element_type=jnp.float32)
    img = img * (logit_scale *
                 jax.lax.rsqrt(jnp.sum(img * img, -1, keepdims=True) + 1e-12))
    txt = txt * jax.lax.rsqrt(jnp.sum(txt * txt, -1, keepdims=True) + 1e-12)
    logits = jnp.dot(img.astype(jnp.bfloat16),
                     txt.astype(jnp.bfloat16).T,
                     preferred_element_type=jnp.float32)
    logp = jax.nn.log_softmax(logits, axis=-1)
    return -jnp.mean(logp[jnp.arange(B), labels])


if __name__ == "__main__":
    key = jax.random.PRNGKey(0)
    k_img, k_txt, k_wi, k_wt, k_lbl = jax.random.split(key, 5)

    B, C, H, W = 8, 3, 24, 24        # input images (NCHW), resized to 16x16
    TXT_DIM, EMBED = 64, 128

    image = jax.random.normal(k_img, (B, C, H, W), dtype=jnp.float32)
    text = jax.random.normal(k_txt, (B, TXT_DIM), dtype=jnp.float32)
    labels = jax.random.randint(k_lbl, (B,), 0, B)

    flat_dim = C * 16 * 16
    w_img = jax.random.normal(k_wi, (flat_dim, EMBED), jnp.float32) / math.sqrt(flat_dim)
    w_txt = jax.random.normal(k_wt, (TXT_DIM, EMBED), jnp.float32) / math.sqrt(TXT_DIM)
    logit_scale = math.exp(math.log(1.0 / 0.07))   # CLIP's learned-scale init

    loss = clip_loss(image, text, w_img, w_txt, labels, logit_scale)
    loss = jax.block_until_ready(loss)

    ref = _reference_loss(image, text, w_img, w_txt, labels, logit_scale)
    assert jnp.allclose(loss, ref, atol=1e-3, rtol=1e-3), (loss, ref)
    # TODO(synk): the real module wraps a full CLIP ViT/text-transformer; here
    # the encoders are synthetic linear projections with deterministic init.
    print("KERNEL_OK")
</pallas_src>

<mosaic_0001>
module attributes {stable_mosaic.version = 11 : i64} {
  func.func @_clip_loss_kernel(%arg0: i32, %arg1: memref<8x768xbf16, #tpu.memory_space<vmem>>, %arg2: memref<8x64xbf16, #tpu.memory_space<vmem>>, %arg3: memref<768x128xbf16, #tpu.memory_space<vmem>>, %arg4: memref<64x128xbf16, #tpu.memory_space<vmem>>, %arg5: memref<8x1xi32, #tpu.memory_space<vmem>>, %arg6: memref<1xf32, #tpu.memory_space<smem>>, %arg7: memref<1x8x128xf32, #tpu.memory_space<vmem>>) attributes {dimension_semantics = [#tpu.dimension_semantics<parallel>], iteration_bounds = array<i64: 1>, scalar_prefetch = 0 : i64, scratch_operands = 0 : i64, tpu.core_type = #tpu.core_type<tc>, window_params = [{transform_indices = @transform_0, window_bounds = array<i64: 8, 768>}, {pipeline_mode = #tpu.pipeline_mode<synchronous>, transform_indices = @transform_1, window_bounds = array<i64: 8, 64>}, {pipeline_mode = #tpu.pipeline_mode<synchronous>, transform_indices = @transform_2, window_bounds = array<i64: 768, 128>}, {pipeline_mode = #tpu.pipeline_mode<synchronous>, transform_indices = @transform_3, window_bounds = array<i64: 64, 128>}, {transform_indices = @transform_4, window_bounds = array<i64: 8, 1>}, {transform_indices = @transform_5, window_bounds = array<i64: 1>}, {transform_indices = @transform_6, window_bounds = array<i64: 1, 8, 128>}]} {
    %c0 = arith.constant 0 : index
    %0 = memref.load %arg6[%c0] : memref<1xf32, #tpu.memory_space<smem>>
    %c0_0 = arith.constant 0 : index
    %c0_1 = arith.constant 0 : index
    %1 = vector.load %arg1[%c0_0, %c0_1] : memref<8x768xbf16, #tpu.memory_space<vmem>>, vector<8x768xbf16>
    %c0_2 = arith.constant 0 : index
    %c0_3 = arith.constant 0 : index
    %2 = vector.load %arg3[%c0_2, %c0_3] : memref<768x128xbf16, #tpu.memory_space<vmem>>, vector<768x128xbf16>
    %cst = arith.constant dense<0.000000e+00> : vector<8x128xf32>
    %3 = tpu.matmul %1, %2, %cst {dimension_numbers = #tpu.dot_dimension_numbers<[1], [0], [0], [1], [0, 0, 1, 1], [], []>} : vector<8x768xbf16>, vector<768x128xbf16>, vector<8x128xf32> -> vector<8x128xf32>
    %c0_4 = arith.constant 0 : index
    %c0_5 = arith.constant 0 : index
    %4 = vector.load %arg2[%c0_4, %c0_5] : memref<8x64xbf16, #tpu.memory_space<vmem>>, vector<8x64xbf16>
    %c0_6 = arith.constant 0 : index
    %c0_7 = arith.constant 0 : index
    %5 = vector.load %arg4[%c0_6, %c0_7] : memref<64x128xbf16, #tpu.memory_space<vmem>>, vector<64x128xbf16>
    %cst_8 = arith.constant dense<0.000000e+00> : vector<8x128xf32>
    %6 = tpu.matmul %4, %5, %cst_8 {dimension_numbers = #tpu.dot_dimension_numbers<[1], [0], [0], [1], [0, 0, 1, 1], [], []>} : vector<8x64xbf16>, vector<64x128xbf16>, vector<8x128xf32> -> vector<8x128xf32>
    %7 = arith.mulf %3, %3 : vector<8x128xf32>
    %cst_9 = arith.constant dense<0.000000e+00> : vector<8xf32>
    %8 = vector.multi_reduction <add>, %7, %cst_9 [1] : vector<8x128xf32> to vector<8xf32>
    %9 = vector.shape_cast %8 : vector<8xf32> to vector<8x1xf32>
    %cst_10 = arith.constant 9.99999996E-13 : f32
    %10 = vector.broadcast %cst_10 : f32 to vector<8x1xf32>
    %11 = arith.addf %9, %10 : vector<8x1xf32>
    %12 = math.rsqrt %11 : vector<8x1xf32>
    %13 = vector.broadcast %0 : f32 to vector<8x1xf32>
    %14 = arith.mulf %13, %12 : vector<8x1xf32>
    %15 = vector.broadcast %14 : vector<8x1xf32> to vector<8x128xf32>
    %16 = arith.mulf %3, %15 : vector<8x128xf32>
    %17 = arith.mulf %6, %6 : vector<8x128xf32>
    %cst_11 = arith.constant dense<0.000000e+00> : vector<8xf32>
    %18 = vector.multi_reduction <add>, %17, %cst_11 [1] : vector<8x128xf32> to vector<8xf32>
    %19 = vector.shape_cast %18 : vector<8xf32> to vector<8x1xf32>
    %cst_12 = arith.constant 9.99999996E-13 : f32
    %20 = vector.broadcast %cst_12 : f32 to vector<8x1xf32>
    %21 = arith.addf %19, %20 : vector<8x1xf32>
    %22 = math.rsqrt %21 : vector<8x1xf32>
    %23 = vector.broadcast %22 : vector<8x1xf32> to vector<8x128xf32>
    %24 = arith.mulf %6, %23 : vector<8x128xf32>
    %25 = arith.truncf %16 : vector<8x128xf32> to vector<8x128xbf16>
    %26 = arith.truncf %24 : vector<8x128xf32> to vector<8x128xbf16>
    %cst_13 = arith.constant dense<0.000000e+00> : vector<8x8xf32>
    %27 = tpu.matmul %25, %26, %cst_13 {dimension_numbers = #tpu.dot_dimension_numbers<[1], [1], [0], [0], [0, 0, 1, 0], [], []>} : vector<8x128xbf16>, vector<8x128xbf16>, vector<8x8xf32> -> vector<8x8xf32>
    %c0_14 = arith.constant 0 : index
    %c0_15 = arith.constant 0 : index
    %28 = vector.load %arg5[%c0_14, %c0_15] : memref<8x1xi32, #tpu.memory_space<vmem>>, vector<8x1xi32>
    %cst_16 = arith.constant dense<0xFF800000> : vector<8xf32>
    %29 = vector.multi_reduction <maximumf>, %27, %cst_16 [1] : vector<8x8xf32> to vector<8xf32>
    %30 = vector.shape_cast %29 : vector<8xf32> to vector<8x1xf32>
    %31 = vector.broadcast %30 : vector<8x1xf32> to vector<8x8xf32>
    %32 = arith.subf %27, %31 : vector<8x8xf32>
    %33 = math.exp %32 : vector<8x8xf32>
    %cst_17 = arith.constant dense<0.000000e+00> : vector<8xf32>
    %34 = vector.multi_reduction <add>, %33, %cst_17 [1] : vector<8x8xf32> to vector<8xf32>
    %35 = vector.shape_cast %34 : vector<8xf32> to vector<8x1xf32>
    %36 = math.log %35 : vector<8x1xf32>
    %37 = arith.addf %30, %36 : vector<8x1xf32>
    %38 = tpu.iota {dimensions = array<i32: 1>} : vector<8x8xi32>
    %39 = vector.broadcast %28 : vector<8x1xi32> to vector<8x8xi32>
    %40 = arith.cmpi eq, %38, %39 : vector<8x8xi32>
    %cst_18 = arith.constant 0.000000e+00 : f32
    %41 = vector.broadcast %cst_18 : f32 to vector<8x8xf32>
    %42 = arith.select %40, %27, %41 : vector<8x8xi1>, vector<8x8xf32>
    %cst_19 = arith.constant dense<0.000000e+00> : vector<8xf32>
    %43 = vector.multi_reduction <add>, %42, %cst_19 [1] : vector<8x8xf32> to vector<8xf32>
    %44 = vector.shape_cast %43 : vector<8xf32> to vector<8x1xf32>
    %c0_i32 = arith.constant 0 : i32
    %45 = vector.broadcast %c0_i32 : i32 to vector<8x1xi32>
    %46 = arith.cmpi sge, %28, %45 : vector<8x1xi32>
    %47 = arith.extui %46 : vector<8x1xi1> to vector<8x1xi32>
    %48 = arith.sitofp %47 : vector<8x1xi32> to vector<8x1xf32>
    %49 = arith.subf %37, %44 : vector<8x1xf32>
    %50 = arith.mulf %49, %48 : vector<8x1xf32>
    %51 = vector.shape_cast %50 : vector<8x1xf32> to vector<1x8x1xf32>
    %cst_20 = arith.constant dense<0.000000e+00> : vector<1xf32>
    %52 = vector.multi_reduction <add>, %51, %cst_20 [1, 2] : vector<1x8x1xf32> to vector<1xf32>
    %53 = vector.shape_cast %52 : vector<1xf32> to vector<1x1x1xf32>
    %54 = vector.extract %53[0, 0, 0] : f32 from vector<1x1x1xf32>
    %55 = vector.broadcast %54 : f32 to vector<1x8x128xf32>
    %c0_21 = arith.constant 0 : index
    %c0_22 = arith.constant 0 : index
    %c0_23 = arith.constant 0 : index
    %56 = vector.load %arg7[%c0_21, %c0_22, %c0_23] : memref<1x8x128xf32, #tpu.memory_space<vmem>>, vector<1x8x128xf32>
    tpu.vector_store %arg7[%c0_21, %c0_22, %c0_23], %55 {strides = array<i32>} : memref<1x8x128xf32, #tpu.memory_space<vmem>>, vector<1x8x128xf32>,
    return
  }
  func.func @transform_0(%arg0: i32) -> (i32, i32) {
    %c0_i32 = arith.constant 0 : i32
    %c0_i32_0 = arith.constant 0 : i32
    return %arg0, %c0_i32 : i32, i32
  }
  func.func @transform_1(%arg0: i32) -> (i32, i32) {
    %c0_i32 = arith.constant 0 : i32
    %c0_i32_0 = arith.constant 0 : i32
    %c0_i32_1 = arith.constant 0 : i32
    return %c0_i32, %c0_i32_0 : i32, i32
  }
  func.func @transform_2(%arg0: i32) -> (i32, i32) {
    %c0_i32 = arith.constant 0 : i32
    %c0_i32_0 = arith.constant 0 : i32
    %c0_i32_1 = arith.constant 0 : i32
    return %c0_i32, %c0_i32_0 : i32, i32
  }
  func.func @transform_3(%arg0: i32) -> (i32, i32) {
    %c0_i32 = arith.constant 0 : i32
    %c0_i32_0 = arith.constant 0 : i32
    %c0_i32_1 = arith.constant 0 : i32
    return %c0_i32, %c0_i32_0 : i32, i32
  }
  func.func @transform_4(%arg0: i32) -> (i32, i32) {
    %c0_i32 = arith.constant 0 : i32
    %c0_i32_0 = arith.constant 0 : i32
    return %arg0, %c0_i32 : i32, i32
  }
  func.func @transform_5(%arg0: i32) -> i32 {
    %c0_i32 = arith.constant 0 : i32
    %c0_i32_0 = arith.constant 0 : i32
    return %c0_i32 : i32
  }
  func.func @transform_6(%arg0: i32) -> (i32, i32, i32) {
    %c0_i32 = arith.constant 0 : i32
    %c0_i32_0 = arith.constant 0 : i32
    %c0_i32_1 = arith.constant 0 : i32
    return %arg0, %c0_i32, %c0_i32_0 : i32, i32, i32
  }
}

</mosaic_0001>

<llo_original>
// kernel: tpu_custom_call.1
$region0: #{tpu_custom_call.1}
  #allocation0 [shape = 'u32[]', space=smem, size = 0x4, offset = 0x4, fixed_abs, tag = 'smem constant byte address 0x4 - core index']
  #allocation1 [shape = 'u32[144,128]{1,0:T(1,128)}', space=vmem, size = 0x12000, scoped, tag = 'internal scratch']
  #allocation2 [shape = 'f32[1]{0:T(128)S(6)}', space=smem, size = 0x200, scoped, tag = 'scoped memory for tpu_custom_call.1']
  %s0 = inlined_call_operand.hbm [shape: bf16[8,768], index: 0, kind: input, shape index: {}]
  %s1 = inlined_call_operand.vmem [shape: bf16[8,64], index: 1, kind: input, shape index: {}]
  %s2 = inlined_call_operand.hbm [shape: bf16[768,128], index: 2, kind: input, shape index: {}]
  %s3 = inlined_call_operand.hbm [shape: bf16[64,128], index: 3, kind: input, shape index: {}]
  %s4 = inlined_call_operand.vmem [shape: s32[8,1], index: 4, kind: input, shape index: {}]
  %s5 = inlined_call_operand.<no memory space> [shape: f32[1], index: 5, kind: input, shape index: {}]
  %s6 = inlined_call_operand.hbm [shape: f32[1,8,128], index: 6, kind: output, shape index: {}]
  %s7 = sld [smem:[#allocation0]]
  $region46: #{tpu_custom_call.1} parent=0
    _
  %s9 = ssub.s32 1, %s7
  %s10 = scalar_select 0, %s9, %s7
  %11 = sst [smem:[#allocation2]] %s5
  $region1: #{tpu_custom_call.1} parent=0
    #allocation3 [shape = 'u8[12288]{0}', space=vmem, size = 0x3000, scoped, tag = 'input window, operand 0, single buffered']
    #allocation4 [shape = 's32[1]{0}', space=sflag, size = 0x4, scoped, tag = 'scoped memory for tpu_custom_call.1']
    #allocation5 [shape = 's32[1]{0}', space=sflag, size = 0x4, scoped, tag = 'scoped memory for tpu_custom_call.1']
    #allocation6 [shape = 'u8[196608]{0}', space=vmem, size = 0x30000, scoped, tag = 'input window, operand 2, single buffered']
    #allocation7 [shape = 's32[1]{0}', space=sflag, size = 0x4, scoped, tag = 'scoped memory for tpu_custom_call.1']
    #allocation8 [shape = 'u8[16384]{0}', space=vmem, size = 0x4000, scoped, tag = 'input window, operand 3, single buffered']
    #allocation9 [shape = 'u8[4096]{0}', space=vmem, size = 0x1000, scoped, tag = 'output window, operand 0, single buffered']
    %12 = vsyncpa [#allocation4], 0
    %13 = vsyncpa [#allocation7], 0
    %14 = vsyncpa [#allocation5], 0
    // Predicated region
    $region2: #{tpu_custom_call.1} parent=1 // pred_check
      _
    $region3: #{tpu_custom_call.1} parent=1 // pred_check_branch
      %16 = sbr.rel (0) target = $region5
    $region4: #{tpu_custom_call.1} parent=1 // pred_region
      %s18 = ssub.s32 384, 384
      %19 = vsyncadd [#allocation4], %s18
      %s21 = sshll.u32 [#allocation3], 4
      %s22 = int_to_ptr.vmem [resolvable:$true] %s21
      %24 = dma.hbm_to_vmem [thread:$0]  %s0, 384, %s22, [#allocation4]
    $region5: #{tpu_custom_call.1} parent=1 // pred_fallthru
      _
    // Predicated region
    $region6: #{tpu_custom_call.1} parent=1 // pred_check
      _
    $region7: #{tpu_custom_call.1} parent=1 // pred_check_branch
      %26 = sbr.rel (0) target = $region9
    $region8: #{tpu_custom_call.1} parent=1 // pred_region
      _
    $region9: #{tpu_custom_call.1} parent=1 // pred_fallthru
      _
    // Predicated region
    $region10: #{tpu_custom_call.1} parent=1 // pred_check
      _
    $region11: #{tpu_custom_call.1} parent=1 // pred_check_branch
      %28 = sbr.rel (0) target = $region13
    $region12: #{tpu_custom_call.1} parent=1 // pred_region
      %s30 = ssub.s32 6144, 6144
      %31 = vsyncadd [#allocation7], %s30
      %s32 = sshll.u32 [#allocation6], 4
      %s33 = int_to_ptr.vmem [resolvable:$true] %s32
      %38 = dma.hbm_to_vmem [thread:$0]  %s2, 6144, %s33, [#allocation7], 64, 64, 4
    $region13: #{tpu_custom_call.1} parent=1 // pred_fallthru
      _
    // Predicated region
    $region14: #{tpu_custom_call.1} parent=1 // pred_check
      _
    $region15: #{tpu_custom_call.1} parent=1 // pred_check_branch
      %40 = sbr.rel (0) target = $region17
    $region16: #{tpu_custom_call.1} parent=1 // pred_region
      %s42 = ssub.s32 512, 512
      %43 = vsyncadd [#allocation7], %s42
      %s44 = sshll.u32 [#allocation8], 4
      %s45 = int_to_ptr.vmem [resolvable:$true] %s44
      %50 = dma.hbm_to_vmem [thread:$0]  %s3, 512, %s45, [#allocation7], 64, 64, 4
    $region17: #{tpu_custom_call.1} parent=1 // pred_fallthru
      _
    // Predicated region
    $region18: #{tpu_custom_call.1} parent=1 // pred_check
      _
    $region19: #{tpu_custom_call.1} parent=1 // pred_check_branch
      %52 = sbr.rel (0) target = $region21
    $region20: #{tpu_custom_call.1} parent=1 // pred_region
      _
    $region21: #{tpu_custom_call.1} parent=1 // pred_fallthru
      _
    // Predicated region
    $region22: #{tpu_custom_call.1} parent=1 // pred_check
      _
    $region23: #{tpu_custom_call.1} parent=1 // pred_check_branch
      %54 = sbr.rel (0) target = $region25
    $region24: #{tpu_custom_call.1} parent=1 // pred_region
      _
    $region25: #{tpu_custom_call.1} parent=1 // pred_fallthru
      _
    // Predicated region
    $region26: #{tpu_custom_call.1} parent=1 // pred_check
      _
    $region27: #{tpu_custom_call.1} parent=1 // pred_check_branch
      %56 = sbr.rel (0) target = $region29
    $region28: #{tpu_custom_call.1} parent=1 // pred_region
      %57 = dma.done [#allocation4], 384
    $region29: #{tpu_custom_call.1} parent=1 // pred_fallthru
      _
    // Predicated region
    $region30: #{tpu_custom_call.1} parent=1 // pred_check
      _
    $region31: #{tpu_custom_call.1} parent=1 // pred_check_branch
      %59 = sbr.rel (0) target = $region33
    $region32: #{tpu_custom_call.1} parent=1 // pred_region
      %60 = dma.done [#allocation7], 6144
    $region33: #{tpu_custom_call.1} parent=1 // pred_fallthru
      _
    // Predicated region
    $region34: #{tpu_custom_call.1} parent=1 // pred_check
      _
    $region35: #{tpu_custom_call.1} parent=1 // pred_check_branch
      %62 = sbr.rel (0) target = $region37
    $region36: #{tpu_custom_call.1} parent=1 // pred_region
      %63 = dma.done [#allocation7], 512
    $region37: #{tpu_custom_call.1} parent=1 // pred_fallthru
      _
    %s65 = sld [smem:[#allocation2]]
    %v66 = vld [vmem:[#allocation3] sm:$0xff]
    %v67 = vld [vmem:[#allocation3 + $0x8] sm:$0xff]
    %v68 = vld [vmem:[#allocation3 + $0x10] sm:$0xff]
    %v69 = vld [vmem:[#allocation6] sm:$0xf]
    %v70 = vld [vmem:[#allocation6 + $0x4] sm:$0xf]
    %v71 = vld [vmem:[#allocation6 + $0x8] sm:$0xf]
    %v72 = vld [vmem:[#allocation6 + $0xc] sm:$0xf]
    %v73 = vld [vmem:[#allocation6 + $0x10] sm:$0xf]
    %v74 = vld [vmem:[#allocation6 + $0x14] sm:$0xf]
    %v75 = vld [vmem:[#allocation6 + $0x18] sm:$0xf]
    %v76 = vld [vmem:[#allocation6 + $0x1c] sm:$0xf]
    %v77 = vld [vmem:[#allocation6 + $0x20] sm:$0xf]
    %v78 = vld [vmem:[#allocation6 + $0x24] sm:$0xf]
    %v79 = vld [vmem:[#allocation6 + $0x28] sm:$0xf]
    %v80 = vld [vmem:[#allocation6 + $0x2c] sm:$0xf]
    %v81 = vld [vmem:[#allocation6 + $0x30] sm:$0xf]
    %v82 = vld [vmem:[#allocation6 + $0x34] sm:$0xf]
    %v83 = vld [vmem:[#allocation6 + $0x38] sm:$0xf]
    %v84 = vld [vmem:[#allocation6 + $0x3c] sm:$0xf]
    %v85 = vld [vmem:[#allocation6 + $0x40] sm:$0xf]
    %v86 = vld [vmem:[#allocation6 + $0x44] sm:$0xf]
    %v87 = vld [vmem:[#allocation6 + $0x48] sm:$0xf]
    %v88 = vld [vmem:[#allocation6 + $0x4c] sm:$0xf]
    %v89 = vld [vmem:[#allocation6 + $0x50] sm:$0xf]
    %v90 = vld [vmem:[#allocation6 + $0x54] sm:$0xf]
    %v91 = vld [vmem:[#allocation6 + $0x58] sm:$0xf]
    %v92 = vld [vmem:[#allocation6 + $0x5c] sm:$0xf]
    %v93 = vld [vmem:[#allocation6 + $0x60] sm:$0xf]
    %v94 = vld [vmem:[#allocation6 + $0x64] sm:$0xf]
    %v95 = vld [vmem:[#allocation6 + $0x68] sm:$0xf]
    %v96 = vld [vmem:[#allocation6 + $0x6c] sm:$0xf]
    %v97 = vld [vmem:[#allocation6 + $0x70] sm:$0xf]
    %v98 = vld [vmem:[#allocation6 + $0x74] sm:$0xf]
    %v99 = vld [vmem:[#allocation6 + $0x78] sm:$0xf]
    %v100 = vld [vmem:[#allocation6 + $0x7c] sm:$0xf]
    %v101 = vld [vmem:[#allocation6 + $0x80] sm:$0xf]
    %v102 = vld [vmem:[#allocation6 + $0x84] sm:$0xf]
    %v103 = vld [vmem:[#allocation6 + $0x88] sm:$0xf]
    %v104 = vld [vmem:[#allocation6 + $0x8c] sm:$0xf]
    %v105 = vld [vmem:[#allocation6 + $0x90] sm:$0xf]
    %v106 = vld [vmem:[#allocation6 + $0x94] sm:$0xf]
    %v107 = vld [vmem:[#allocation6 + $0x98] sm:$0xf]
    %v108 = vld [vmem:[#allocation6 + $0x9c] sm:$0xf]
    %v109 = vld [vmem:[#allocation6 + $0xa0] sm:$0xf]
    %v110 = vld [vmem:[#allocation6 + $0xa4] sm:$0xf]
    %v111 = vld [vmem:[#allocation6 + $0xa8] sm:$0xf]
    %v112 = vld [vmem:[#allocation6 + $0xac] sm:$0xf]
    %v113 = vld [vmem:[#allocation6 + $0xb0] sm:$0xf]
    %v114 = vld [vmem:[#allocation6 + $0xb4] sm:$0xf]
    %v115 = vld [vmem:[#allocation6 + $0xb8] sm:$0xf]
    %v116 = vld [vmem:[#allocation6 + $0xbc] sm:$0xf]
    %v117 = vld [vmem:[#allocation6 + $0xc0] sm:$0xf]
    %v118 = vld [vmem:[#allocation6 + $0xc4] sm:$0xf]
    %v119 = vld [vmem:[#allocation6 + $0xc8] sm:$0xf]
    %v120 = vld [vmem:[#allocation6 + $0xcc] sm:$0xf]
    %v121 = vld [vmem:[#allocation6 + $0xd0] sm:$0xf]
    %v122 = vld [vmem:[#allocation6 + $0xd4] sm:$0xf]
    %v123 = vld [vmem:[#allocation6 + $0xd8] sm:$0xf]
    %v124 = vld [vmem:[#allocation6 + $0xdc] sm:$0xf]
    %v125 = vld [vmem:[#allocation6 + $0xe0] sm:$0xf]
    %v126 = vld [vmem:[#allocation6 + $0xe4] sm:$0xf]
    %v127 = vld [vmem:[#allocation6 + $0xe8] sm:$0xf]
    %v128 = vld [vmem:[#allocation6 + $0xec] sm:$0xf]
    %v129 = vld [vmem:[#allocation6 + $0xf0] sm:$0xf]
    %v130 = vld [vmem:[#allocation6 + $0xf4] sm:$0xf]
    %v131 = vld [vmem:[#allocation6 + $0xf8] sm:$0xf]
    %v132 = vld [vmem:[#allocation6 + $0xfc] sm:$0xf]
    %v133 = vld [vmem:[#allocation6 + $0x100] sm:$0xf]
    %v134 = vld [vmem:[#allocation6 + $0x104] sm:$0xf]
    %v135 = vld [vmem:[#allocation6 + $0x108] sm:$0xf]
    %v136 = vld [vmem:[#allocation6 + $0x10c] sm:$0xf]
    %v137 = vld [vmem:[#allocation6 + $0x110] sm:$0xf]
    %v138 = vld [vmem:[#allocation6 + $0x114] sm:$0xf]
    %v139 = vld [vmem:[#allocation6 + $0x118] sm:$0xf]
    %v140 = vld [vmem:[#allocation6 + $0x11c] sm:$0xf]
    %v141 = vld [vmem:[#allocation6 + $0x120] sm:$0xf]
    %v142 = vld [vmem:[#allocation6 + $0x124] sm:$0xf]
    %v143 = vld [vmem:[#allocation6 + $0x128] sm:$0xf]
    %v144 = vld [vmem:[#allocation6 + $0x12c] sm:$0xf]
    %v145 = vld [vmem:[#allocation6 + $0x130] sm:$0xf]
    %v146 = vld [vmem:[#allocation6 + $0x134] sm:$0xf]
    %v147 = vld [vmem:[#allocation6 + $0x138] sm:$0xf]
    %v148 = vld [vmem:[#allocation6 + $0x13c] sm:$0xf]
    %v149 = vld [vmem:[#allocation6 + $0x140] sm:$0xf]
    %v150 = vld [vmem:[#allocation6 + $0x144] sm:$0xf]
    %v151 = vld [vmem:[#allocation6 + $0x148] sm:$0xf]
    %v152 = vld [vmem:[#allocation6 + $0x14c] sm:$0xf]
    %v153 = vld [vmem:[#allocation6 + $0x150] sm:$0xf]
    %v154 = vld [vmem:[#allocation6 + $0x154] sm:$0xf]
    %v155 = vld [vmem:[#allocation6 + $0x158] sm:$0xf]
    %v156 = vld [vmem:[#allocation6 + $0x15c] sm:$0xf]
    %v157 = vld [vmem:[#allocation6 + $0x160] sm:$0xf]
    %v158 = vld [vmem:[#allocation6 + $0x164] sm:$0xf]
    %v159 = vld [vmem:[#allocation6 + $0x168] sm:$0xf]
    %v160 = vld [vmem:[#allocation6 + $0x16c] sm:$0xf]
    %v161 = vld [vmem:[#allocation6 + $0x170] sm:$0xf]
    %v162 = vld [vmem:[#allocation6 + $0x174] sm:$0xf]
    %v163 = vld [vmem:[#allocation6 + $0x178] sm:$0xf]
    %v164 = vld [vmem:[#allocation6 + $0x17c] sm:$0xf]
    %v168 = vunpack.c.l.b16 %v66
    %v169 = vunpack.c.h.b16 %v66
    %v170 = vunpack.c.l.b16 %v67
    %v171 = vunpack.c.h.b16 %v67
    %v172 = vunpack.c.l.b16 %v68
    %v173 = vunpack.c.h.b16 %v68
    %v174 = vpack.c.b16 %v168, %v168
    %v175 = vpack.c.b16 %v169, %v169
    %v176 = vpack.c.b16 %v170, %v170
    %v177 = vpack.c.b16 %v171, %v171
    %v178 = vpack.c.b16 %v172, %v172
    %v179 = vpack.c.b16 %v173, %v173
    %v282 = vunpack.c.l.b16 %v69
    %v283 = vunpack.c.l.b16 %v70
    %v284 = vunpack.c.l.b16 %v71
    %v285 = vunpack.c.l.b16 %v72
    %v286 = vunpack.c.l.b16 %v73
    %v287 = vunpack.c.l.b16 %v74
    %v288 = vunpack.c.l.b16 %v75
    %v289 = vunpack.c.l.b16 %v76
    %v290 = vunpack.c.l.b16 %v77
    %v291 = vunpack.c.l.b16 %v78
    %v292 = vunpack.c.l.b16 %v79
    %v293 = vunpack.c.l.b16 %v80
    %v294 = vunpack.c.l.b16 %v81
    %v295 = vunpack.c.l.b16 %v82
    %v296 = vunpack.c.l.b16 %v83
    %v297 = vunpack.c.l.b16 %v84
    %v298 = vunpack.c.l.b16 %v85
    %v299 = vunpack.c.l.b16 %v86
    %v300 = vunpack.c.l.b16 %v87
    %v301 = vunpack.c.l.b16 %v88
    %v302 = vunpack.c.l.b16 %v89
    %v303 = vunpack.c.l.b16 %v90
    %v304 = vunpack.c.l.b16 %v91
    %v305 = vunpack.c.l.b16 %v92
    %v306 = vunpack.c.l.b16 %v93
    %v307 = vunpack.c.l.b16 %v94
    %v308 = vunpack.c.l.b16 %v95
    %v309 = vunpack.c.l.b16 %v96
    %v310 = vunpack.c.l.b16 %v97
    %v311 = vunpack.c.l.b16 %v98
    %v312 = vunpack.c.l.b16 %v99
    %v313 = vunpack.c.l.b16 %v100
    %v314 = vunpack.c.l.b16 %v101
    %v315 = vunpack.c.l.b16 %v102
    %v316 = vunpack.c.l.b16 %v103
    %v317 = vunpack.c.l.b16 %v104
    %v318 = vunpack.c.l.b16 %v105
    %v319 = vunpack.c.l.b16 %v106
    %v320 = vunpack.c.l.b16 %v107
    %v321 = vunpack.c.l.b16 %v108
    %v322 = vunpack.c.l.b16 %v109
    %v323 = vunpack.c.l.b16 %v110
    %v324 = vunpack.c.l.b16 %v111
    %v325 = vunpack.c.l.b16 %v112
    %v326 = vunpack.c.l.b16 %v113
    %v327 = vunpack.c.l.b16 %v114
    %v328 = vunpack.c.l.b16 %v115
    %v329 = vunpack.c.l.b16 %v116
    %v330 = vunpack.c.l.b16 %v117
    %v331 = vunpack.c.l.b16 %v118
    %v332 = vunpack.c.l.b16 %v119
    %v333 = vunpack.c.l.b16 %v120
    %v334 = vunpack.c.l.b16 %v121
    %v335 = vunpack.c.l.b16 %v122
    %v336 = vunpack.c.l.b16 %v123
    %v337 = vunpack.c.l.b16 %v124
    %v338 = vunpack.c.l.b16 %v125
    %v339 = vunpack.c.l.b16 %v126
    %v340 = vunpack.c.l.b16 %v127
    %v341 = vunpack.c.l.b16 %v128
    %v342 = vunpack.c.l.b16 %v129
    %v343 = vunpack.c.l.b16 %v130
    %v344 = vunpack.c.l.b16 %v131
    %v345 = vunpack.c.l.b16 %v132
    %v346 = vunpack.c.l.b16 %v133
    %v347 = vunpack.c.l.b16 %v134
    %v348 = vunpack.c.l.b16 %v135
    %v349 = vunpack.c.l.b16 %v136
    %v350 = vunpack.c.l.b16 %v137
    %v351 = vunpack.c.l.b16 %v138
    %v352 = vunpack.c.l.b16 %v139
    %v353 = vunpack.c.l.b16 %v140
    %v354 = vunpack.c.l.b16 %v141
    %v355 = vunpack.c.l.b16 %v142
    %v356 = vunpack.c.l.b16 %v143
    %v357 = vunpack.c.l.b16 %v144
    %v358 = vunpack.c.l.b16 %v145
    %v359 = vunpack.c.l.b16 %v146
    %v360 = vunpack.c.l.b16 %v147
    %v361 = vunpack.c.l.b16 %v148
    %v362 = vunpack.c.l.b16 %v149
    %v363 = vunpack.c.l.b16 %v150
    %v364 = vunpack.c.l.b16 %v151
    %v365 = vunpack.c.l.b16 %v152
    %v366 = vunpack.c.l.b16 %v153
    %v367 = vunpack.c.l.b16 %v154
    %v368 = vunpack.c.l.b16 %v155
    %v369 = vunpack.c.l.b16 %v156
    %v370 = vunpack.c.l.b16 %v157
    %v371 = vunpack.c.l.b16 %v158
    %v372 = vunpack.c.l.b16 %v159
    %v373 = vunpack.c.l.b16 %v160
    %v374 = vunpack.c.l.b16 %v161
    %v375 = vunpack.c.l.b16 %v162
    %v376 = vunpack.c.l.b16 %v163
    %v377 = vunpack.c.l.b16 %v164
    %v378 = vpack.c.b16 %v283, %v282
    %v379 = vpack.c.b16 %v285, %v284
    %v380 = vpack.c.b16 %v287, %v286
    %v381 = vpack.c.b16 %v289, %v288
    %v382 = vpack.c.b16 %v291, %v290
    %v383 = vpack.c.b16 %v293, %v292
    %v384 = vpack.c.b16 %v295, %v294
    %v385 = vpack.c.b16 %v297, %v296
    %v386 = vpack.c.b16 %v299, %v298
    %v387 = vpack.c.b16 %v301, %v300
    %v388 = vpack.c.b16 %v303, %v302
    %v389 = vpack.c.b16 %v305, %v304
    %v390 = vpack.c.b16 %v307, %v306
    %v391 = vpack.c.b16 %v309, %v308
    %v392 = vpack.c.b16 %v311, %v310
    %v393 = vpack.c.b16 %v313, %v312
    %v394 = vpack.c.b16 %v315, %v314
    %v395 = vpack.c.b16 %v317, %v316
    %v396 = vpack.c.b16 %v319, %v318
    %v397 = vpack.c.b16 %v321, %v320
    %v398 = vpack.c.b16 %v323, %v322
    %v399 = vpack.c.b16 %v325, %v324
    %v400 = vpack.c.b16 %v327, %v326
    %v401 = vpack.c.b16 %v329, %v328
    %v402 = vpack.c.b16 %v331, %v330
    %v403 = vpack.c.b16 %v333, %v332
    %v404 = vpack.c.b16 %v335, %v334
    %v405 = vpack.c.b16 %v337, %v336
    %v406 = vpack.c.b16 %v339, %v338
    %v407 = vpack.c.b16 %v341, %v340
    %v408 = vpack.c.b16 %v343, %v342
    %v409 = vpack.c.b16 %v345, %v344
    %v410 = vpack.c.b16 %v347, %v346
    %v411 = vpack.c.b16 %v349, %v348
    %v412 = vpack.c.b16 %v351, %v350
    %v413 = vpack.c.b16 %v353, %v352
    %v414 = vpack.c.b16 %v355, %v354
    %v415 = vpack.c.b16 %v357, %v356
    %v416 = vpack.c.b16 %v359, %v358
    %v417 = vpack.c.b16 %v361, %v360
    %v418 = vpack.c.b16 %v363, %v362
    %v419 = vpack.c.b16 %v365, %v364
    %v420 = vpack.c.b16 %v367, %v366
    %v421 = vpack.c.b16 %v369, %v368
    %v422 = vpack.c.b16 %v371, %v370
    %v423 = vpack.c.b16 %v373, %v372
    %v424 = vpack.c.b16 %v375, %v374
    %v425 = vpack.c.b16 %v377, %v376
    %474 = vmatprep.subr.bf16.mxu0 0
    %475 = vmatpush1.bf16.msra.mxu0 %v378
    %476 = vmatprep.subr.bf16.mxu0 0
    %477 = vmatpush1.bf16.msra.mxu0 %v379
    %478 = vmatprep.subr.bf16.mxu0 0
    %479 = vmatpush1.bf16.msra.mxu0 %v380
    %480 = vmatprep.subr.bf16.mxu0 0
    %481 = vmatpush1.bf16.msra.mxu0 %v381
    %482 = vmatprep.subr.bf16.mxu0 0
    %483 = vmatpush1.bf16.msra.mxu0 %v382
    %484 = vmatprep.subr.bf16.mxu0 0
    %485 = vmatpush1.bf16.msra.mxu0 %v383
    %486 = vmatprep.subr.bf16.mxu0 0
    %487 = vmatpush1.bf16.msra.mxu0 %v384
    %488 = vmatprep.subr.bf16.mxu0 0
    %489 = vmatpush1.bf16.msra.mxu0 %v385
    %490 = vmatprep.subr.bf16.mxu0 0
    %491 = vmatpush1.bf16.msra.mxu0 %v386
    %492 = vmatprep.subr.bf16.mxu0 0
    %493 = vmatpush1.bf16.msra.mxu0 %v387
    %494 = vmatprep.subr.bf16.mxu0 0
    %495 = vmatpush1.bf16.msra.mxu0 %v388
    %496 = vmatprep.subr.bf16.mxu0 0
    %497 = vmatpush1.bf16.msra.mxu0 %v389
    %498 = vmatprep.subr.bf16.mxu0 0
    %499 = vmatpush1.bf16.msra.mxu0 %v390
    %500 = vmatprep.subr.bf16.mxu0 0
    %501 = vmatpush1.bf16.msra.mxu0 %v391
    %502 = vmatprep.subr.bf16.mxu0 0
    %503 = vmatpush1.bf16.msra.mxu0 %v392
    %504 = vmatprep.subr.bf16.mxu0 0
    %505 = vmatpush1.bf16.msra.mxu0 %v393
    %506 = vmatprep.mubr.bf16.mxu0 %v175
    %507 = vmatmul.mubr.bf16.gmra.mrb[0].mxu0 %v174
    %v508 = vpop.f32.mrb[0].mxu0
    %v509 = vadd.f32 0.0, %v508
    %v510 = vpop.f32.mrb[0].mxu0
    %v511 = vpop.f32.mrb[0].mxu0
    %v512 = vpop.f32.mrb[0].mxu0
    %513 = vdwg.mxu0
    %514 = vmatprep.subr.bf16.mxu0 0
    %515 = vmatpush1.bf16.msra.mxu0 %v394
    %516 = vmatprep.subr.bf16.mxu0 0
    %517 = vmatpush1.bf16.msra.mxu0 %v395
    %518 = vmatprep.subr.bf16.mxu0 0
    %519 = vmatpush1.bf16.msra.mxu0 %v396
    %520 = vmatprep.subr.bf16.mxu0 0
    %521 = vmatpush1.bf16.msra.mxu0 %v397
    %522 = vmatprep.subr.bf16.mxu0 0
    %523 = vmatpush1.bf16.msra.mxu0 %v398
    %524 = vmatprep.subr.bf16.mxu0 0
    %525 = vmatpush1.bf16.msra.mxu0 %v399
    %526 = vmatprep.subr.bf16.mxu0 0
    %527 = vmatpush1.bf16.msra.mxu0 %v400
    %528 = vmatprep.subr.bf16.mxu0 0
    %529 = vmatpush1.bf16.msra.mxu0 %v401
    %530 = vmatprep.subr.bf16.mxu0 0
    %531 = vmatpush1.bf16.msra.mxu0 %v402
    %532 = vmatprep.subr.bf16.mxu0 0
    %533 = vmatpush1.bf16.msra.mxu0 %v403
    %534 = vmatprep.subr.bf16.mxu0 0
    %535 = vmatpush1.bf16.msra.mxu0 %v404
    %536 = vmatprep.subr.bf16.mxu0 0
    %537 = vmatpush1.bf16.msra.mxu0 %v405
    %538 = vmatprep.subr.bf16.mxu0 0
    %539 = vmatpush1.bf16.msra.mxu0 %v406
    %540 = vmatprep.subr.bf16.mxu0 0
    %541 = vmatpush1.bf16.msra.mxu0 %v407
    %542 = vmatprep.subr.bf16.mxu0 0
    %543 = vmatpush1.bf16.msra.mxu0 %v408
    %544 = vmatprep.subr.bf16.mxu0 0
    %545 = vmatpush1.bf16.msra.mxu0 %v409
    %546 = vmatprep.mubr.bf16.mxu0 %v177
    %547 = vmatmul.mubr.bf16.gmra.mrb[0].mxu0 %v176
    %v548 = vpop.f32.mrb[0].mxu0
    %v549 = vadd.f32 %v509, %v548
    %v550 = vpop.f32.mrb[0].mxu0
    %v551 = vpop.f32.mrb[0].mxu0
    %v552 = vpop.f32.mrb[0].mxu0
    %553 = vdwg.mxu0
    %554 = vmatprep.subr.bf16.mxu0 0
    %555 = vmatpush1.bf16.msra.mxu0 %v410
    %556 = vmatprep.subr.bf16.mxu0 0
    %557 = vmatpush1.bf16.msra.mxu0 %v411
    %558 = vmatprep.subr.bf16.mxu0 0
    %559 = vmatpush1.bf16.msra.mxu0 %v412
    %560 = vmatprep.subr.bf16.mxu0 0
    %561 = vmatpush1.bf16.msra.mxu0 %v413
    %562 = vmatprep.subr.bf16.mxu0 0
    %563 = vmatpush1.bf16.msra.mxu0 %v414
    %564 = vmatprep.subr.bf16.mxu0 0
    %565 = vmatpush1.bf16.msra.mxu0 %v415
    %566 = vmatprep.subr.bf16.mxu0 0
    %567 = vmatpush1.bf16.msra.mxu0 %v416
    %568 = vmatprep.subr.bf16.mxu0 0
    %569 = vmatpush1.bf16.msra.mxu0 %v417
    %570 = vmatprep.subr.bf16.mxu0 0
    %571 = vmatpush1.bf16.msra.mxu0 %v418
    %572 = vmatprep.subr.bf16.mxu0 0
    %573 = vmatpush1.bf16.msra.mxu0 %v419
    %574 = vmatprep.subr.bf16.mxu0 0
    %575 = vmatpush1.bf16.msra.mxu0 %v420
    %576 = vmatprep.subr.bf16.mxu0 0
    %577 = vmatpush1.bf16.msra.mxu0 %v421
    %578 = vmatprep.subr.bf16.mxu0 0
    %579 = vmatpush1.bf16.msra.mxu0 %v422
    %580 = vmatprep.subr.bf16.mxu0 0
    %581 = vmatpush1.bf16.msra.mxu0 %v423
    %582 = vmatprep.subr.bf16.mxu0 0
    %583 = vmatpush1.bf16.msra.mxu0 %v424
    %584 = vmatprep.subr.bf16.mxu0 0
    %585 = vmatpush1.bf16.msra.mxu0 %v425
    %586 = vmatprep.mubr.bf16.mxu0 %v179
    %587 = vmatmul.mubr.bf16.gmra.mrb[0].mxu0 %v178
    %v588 = vpop.f32.mrb[0].mxu0
    %v589 = vadd.f32 %v549, %v588
    %v590 = vpop.f32.mrb[0].mxu0
    %v591 = vpop.f32.mrb[0].mxu0
    %v592 = vpop.f32.mrb[0].mxu0
    %593 = vdwg.mxu0
    %v594 = vld [vmem:[%s1] sm:$0xf]
    %v595 = vld [vmem:[#allocation8] sm:$0xf]
    %v596 = vld [vmem:[#allocation8 + $0x4] sm:$0xf]
    %v597 = vld [vmem:[#allocation8 + $0x8] sm:$0xf]
    %v598 = vld [vmem:[#allocation8 + $0xc] sm:$0xf]
    %v599 = vld [vmem:[#allocation8 + $0x10] sm:$0xf]
    %v600 = vld [vmem:[#allocation8 + $0x14] sm:$0xf]
    %v601 = vld [vmem:[#allocation8 + $0x18] sm:$0xf]
    %v602 = vld [vmem:[#allocation8 + $0x1c] sm:$0xf]
    %v611 = vunpack.c.l.b16 %v595
    %v612 = vunpack.c.l.b16 %v596
    %v613 = vunpack.c.l.b16 %v597
    %v614 = vunpack.c.l.b16 %v598
    %v615 = vunpack.c.l.b16 %v599
    %v616 = vunpack.c.l.b16 %v600
    %v617 = vunpack.c.l.b16 %v601
    %v618 = vunpack.c.l.b16 %v602
    %v619 = vpack.c.b16 %v612, %v611
    %v620 = vpack.c.b16 %v614, %v613
    %v621 = vpack.c.b16 %v616, %v615
    %v622 = vpack.c.b16 %v618, %v617
    %vm627 = vcmask 523264
    %v629 = vsel %vm627, %v594, 0
    %631 = vmatprep.subr.bf16.mxu0 0
    %632 = vmatpush1.bf16.msra.mxu0 %v619
    %633 = vmatprep.subr.bf16.mxu0 0
    %634 = vmatpush1.bf16.msra.mxu0 %v620
    %635 = vmatprep.subr.bf16.mxu0 0
    %636 = vmatpush1.bf16.msra.mxu0 %v621
    %637 = vmatprep.subr.bf16.mxu0 0
    %638 = vmatpush1.bf16.msra.mxu0 %v622
    %639 = vmatprep.subr.bf16.mxu0 0
    %640 = vmatpush1.bf16.msra.mxu0 0
    %641 = vmatprep.subr.bf16.mxu0 0
    %642 = vmatpush1.bf16.msra.mxu0 0
    %643 = vmatprep.subr.bf16.mxu0 0
    %644 = vmatpush1.bf16.msra.mxu0 0
    %645 = vmatprep.subr.bf16.mxu0 0
    %646 = vmatpush1.bf16.msra.mxu0 0
    %647 = vmatprep.subr.bf16.mxu0 0
    %648 = vmatpush1.bf16.msra.mxu0 0
    %649 = vmatprep.subr.bf16.mxu0 0
    %650 = vmatpush1.bf16.msra.mxu0 0
    %651 = vmatprep.subr.bf16.mxu0 0
    %652 = vmatpush1.bf16.msra.mxu0 0
    %653 = vmatprep.subr.bf16.mxu0 0
    %654 = vmatpush1.bf16.msra.mxu0 0
    %655 = vmatprep.subr.bf16.mxu0 0
    %656 = vmatpush1.bf16.msra.mxu0 0
    %657 = vmatprep.subr.bf16.mxu0 0
    %658 = vmatpush1.bf16.msra.mxu0 0
    %659 = vmatprep.subr.bf16.mxu0 0
    %660 = vmatpush1.bf16.msra.mxu0 0
    %661 = vmatprep.subr.bf16.mxu0 0
    %662 = vmatpush1.bf16.msra.mxu0 0
    %663 = vmatprep.mubr.bf16.mxu0 0
    %664 = vmatmul.mubr.bf16.gmra.mrb[0].mxu0 %v629
    %v665 = vpop.f32.mrb[0].mxu0
    %v666 = vadd.f32 0.0, %v665
    %v667 = vpop.f32.mrb[0].mxu0
    %v668 = vpop.f32.mrb[0].mxu0
    %v669 = vpop.f32.mrb[0].mxu0
    %670 = vdwg.mxu0
    %v671 = vmul.f32 %v589, %v589
    %672 = vadd.xlane.f32.xlu0 %v671
    %v673 = vpop.xlane.xlu0 %672
    %v674 = vadd.f32 %v673, 1e-12
    %v675 = vrsqrt.pop %v674
    %v676 = vstv %s65
    %v677 = vmul.f32 %v676, %v675
    %v678 = vmul.f32 %v589, %v677
    %v679 = vmul.f32 %v666, %v666
    %680 = vadd.xlane.f32.xlu0 %v679
    %v681 = vpop.xlane.xlu0 %680
    %v682 = vadd.f32 %v681, 1e-12
    %v683 = vrsqrt.pop %v682
    %v684 = vmul.f32 %v666, %v683
    %v685 = vpack.c.bf16 %v678, %v678
    %v686 = vpack.c.bf16 %v684, %v684
    %687 = vmatprep.subr.bf16.mxu0 0
    %688 = vmatpush1.bf16.xpose.msra.mxu0 %v686
    %689 = vmatprep.subr.bf16.mxu0 0
    %690 = vmatpush1.bf16.xpose.msra.mxu0 0
    %691 = vmatprep.subr.bf16.mxu0 0
    %692 = vmatpush1.bf16.xpose.msra.mxu0 0
    %693 = vmatprep.subr.bf16.mxu0 0
    %694 = vmatpush1.bf16.xpose.msra.mxu0 0
    %695 = vmatprep.subr.bf16.mxu0 0
    %696 = vmatpush1.bf16.xpose.msra.mxu0 0
    %697 = vmatprep.subr.bf16.mxu0 0
    %698 = vmatpush1.bf16.xpose.msra.mxu0 0
    %699 = vmatprep.subr.bf16.mxu0 0
    %700 = vmatpush1.bf16.xpose.msra.mxu0 0
    %701 = vmatprep.subr.bf16.mxu0 0
    %702 = vmatpush1.bf16.xpose.msra.mxu0 0
    %703 = vmatprep.subr.bf16.mxu0 0
    %704 = vmatpush1.bf16.xpose.msra.mxu0 0
    %705 = vmatprep.subr.bf16.mxu0 0
    %706 = vmatpush1.bf16.xpose.msra.mxu0 0
    %707 = vmatprep.subr.bf16.mxu0 0
    %708 = vmatpush1.bf16.xpose.msra.mxu0 0
    %709 = vmatprep.subr.bf16.mxu0 0
    %710 = vmatpush1.bf16.xpose.msra.mxu0 0
    %711 = vmatprep.subr.bf16.mxu0 0
    %712 = vmatpush1.bf16.xpose.msra.mxu0 0
    %713 = vmatprep.subr.bf16.mxu0 0
    %714 = vmatpush1.bf16.xpose.msra.mxu0 0
    %715 = vmatprep.subr.bf16.mxu0 0
    %716 = vmatpush1.bf16.xpose.msra.mxu0 0
    %717 = vmatprep.subr.bf16.mxu0 0
    %718 = vmatpush1.bf16.xpose.msra.mxu0 0
    %719 = vmatprep.mubr.bf16.mxu0 0
    %720 = vmatmul.mubr.bf16.gmra.mrb[0].mxu0 %v685
    %v721 = vpop.f32.mrb[0].mxu0
    %v722 = vadd.f32 0.0, %v721
    %v723 = vpop.f32.mrb[0].mxu0
    %v724 = vpop.f32.mrb[0].mxu0
    %v725 = vpop.f32.mrb[0].mxu0
    %726 = vdwg.mxu0
    %v727 = vld [vmem:[%s4] sm:$0xff]
    %vm728 = vcmask 64512
    %v729 = vsel %vm728, %v722, -inf
    %730 = vmax.xlane.f32.xlu0 %v729
    %v731 = vpop.xlane.xlu0 %730
    %v732 = vsub.f32 %v722, %v731
    %v733 = vmul.f32 %v732, 1.442695
    %v734 = vpow.pop %v733
    %v735 = vsel %vm728, %v734, 0.0
    %736 = vadd.xlane.f32.xlu0 %v735
    %v737 = vpop.xlane.xlu0 %736
    %v738 = vlog2.pop %v737
    %v739 = vmul.f32 %v738, 0.6931472
    %v740 = vadd.f32 %v731, %v739
    %v741 = vlaneseq
    %v742 = vand.u32 %v741, 127
    %743 = vset.pattern.permute.xlu0 0
    %744 = vperm.xlu0 %743, %v727
    %v745 = vpop.permute.xlu0 %744
    %vm746 = vcmp.eq.s32.totalorder %v742, %v745
    %v747 = vsel %vm746, %v722, 0.0
    %v748 = vsel %vm728, %v747, 0.0
    %749 = vadd.xlane.f32.xlu0 %v748
    %v750 = vpop.xlane.xlu0 %749
    %vm751 = vcmp.ge.s32.totalorder %v727, 0
    %v752 = vsel %vm751, 1, 0
    %v753 = vcvt.s32.f32 %v752
    %v754 = vsub.f32 %v740, %v750
    %v755 = vmul.f32 %v754, %v753
    %vm756 = vcmask 7168
    %v757 = vsel %vm756, %v755, 0.0
    %758 = vadd.xlane.f32.xlu0 %v757
    %v759 = vpop.xlane.xlu0 %758
    %v760 = vrot.slane %v759, 4
    %v761 = vadd.f32 %v759, %v760
    %v762 = vrot.slane %v761, 2
    %v763 = vadd.f32 %v761, %v762
    %v764 = vrot.slane %v763, 1
    %v765 = vadd.f32 %v763, %v764
    %s766 = vtos %v765
    %v767 = vstv %s766
    %768 = vst [vmem:[#allocation9] sm:$0xff] %v767
    // Predicated region
    $region38: #{tpu_custom_call.1} parent=1 // pred_check
      _
    $region39: #{tpu_custom_call.1} parent=1 // pred_check_branch
      %770 = sbr.rel (0) target = $region41
    $region40: #{tpu_custom_call.1} parent=1 // pred_region
      %s772 = ssub.s32 128, 128
      %773 = vsyncadd [#allocation5], %s772
      %s775 = sshll.u32 [#allocation9], 4
      %s776 = int_to_ptr.vmem [resolvable:$true] %s775
      %778 = dma.vmem_to_hbm [thread:$0]  %s776, 128, %s6, [#allocation5]
    $region41: #{tpu_custom_call.1} parent=1 // pred_fallthru
      _
    // Predicated region
    $region42: #{tpu_custom_call.1} parent=1 // pred_check
      _
    $region43: #{tpu_custom_call.1} parent=1 // pred_check_branch
      %780 = sbr.rel (0) target = $region45
    $region44: #{tpu_custom_call.1} parent=1 // pred_region
      %781 = dma.done [#allocation5], 128
    $region45: #{tpu_custom_call.1} parent=1 // pred_fallthru
      _
    %782 = vsyncpa [#allocation4], 1
    %783 = vsyncpa [#allocation7], 1
    %784 = vsyncpa [#allocation5], 1

</llo_original>
